<compile_context>
chip_gen: v7x
topology: tpu7x:2x2x1
jax: 0.10.0
libtpu: 0.0.40
codegen_flags: <defaults>
</compile_context>

<pallas_src>
import math
import functools

import jax
import jax.numpy as jnp
from jax.experimental import pallas as pl
from jax.experimental.pallas import tpu as pltpu


def _eca_kernel_size(channels, gamma=2, b=1):
    k = int(abs((math.log(channels, 2) + b) / gamma))
    return k if k % 2 else k + 1


def _pick_bblk(B, C, HW, itemsize):
    """Largest divisor of B such that the (Bblk, C, HW) block stays within a VMEM
    budget (in+out double-buffered ~= 4x block bytes) while keeping >= 2 grid steps
    when B >= 2 (v7x has two TensorCores; 'parallel' grid steps shard across them)."""
    budget = 4 * 1024 * 1024  # bytes per block
    best = 1
    for cand in range(1, B + 1):
        if B % cand:
            continue
        if cand * C * HW * itemsize > budget:
            continue
        if B >= 2 and B // cand < 2:
            continue
        best = cand
    return best


def _cbam_kernel(w1_ref, wm_ref, x_ref, o_ref, *, k1, k2, H, W, Bblk):
    """w1_ref : (k1,) f32 SMEM                 - Conv1d(1,1,k1) weight (ECA channel attention)
       wm_ref : (k2*k2, 2*Bblk, H*W) f32 VMEM  - per-tap conv weight x zero-padding mask
                                                  rows [0,Bblk)=max-map rows, [Bblk,2*Bblk)=mean-map rows
       x_ref / o_ref: (Bblk, C, H*W) VMEM      - Bblk samples, spatial dims flattened (lane-dense)
    """
    HW = H * W
    pad1 = (k1 - 1) // 2
    pad2 = (k2 - 1) // 2
    C = x_ref.shape[1]

    xc_list, max_rows, mean_rows = [], [], []
    for b in range(Bblk):                                       # unrolled; Bblk is small & static
        xb = x_ref[b].astype(jnp.float32)                       # (C, HW)

        # ---------------- channel attention (ECA) ----------------
        # AdaptiveAvg/MaxPool2d(1) == reductions over the flattened spatial (lane) axis.
        # Conv1d is linear & bias-free, so conv(avg) + conv(max) == conv(avg + max).
        pooled = (jnp.sum(xb, axis=1, keepdims=True) * (1.0 / HW)
                  + jnp.max(xb, axis=1, keepdims=True))         # (C, 1)
        if pad1 > 0:
            zpad = jnp.zeros((pad1, 1), jnp.float32)
            pp = jnp.concatenate([zpad, pooled, zpad], axis=0)  # (C + 2*pad1, 1)
        else:
            pp = pooled
        ca_logit = jnp.zeros((C, 1), jnp.float32)
        for t in range(k1):                                     # tiny: k1 taps on (C, 1)
            ca_logit = ca_logit + w1_ref[t] * pp[t:t + C, :]
        ca = jax.nn.sigmoid(ca_logit)                           # (C, 1), EUP
        xc = xb * ca                                            # (C, HW), lane broadcast
        xc_list.append(xc)

        # per-sample channel-max / channel-mean maps for the spatial attention
        max_rows.append(jnp.max(xc, axis=0, keepdims=True))                 # (1, HW)
        mean_rows.append(jnp.sum(xc, axis=0, keepdims=True) * (1.0 / C))    # (1, HW)

    # ---------------- spatial attention ----------------
    # Stack all maps: one lane rotation per tap covers every row (half the XLU work
    # of rolling max & mean separately; fills sublanes as Bblk grows).
    M = jnp.concatenate(max_rows + mean_rows, axis=0)           # (2*Bblk, HW)

    acc = jnp.zeros((2 * Bblk, HW), jnp.float32)
    for dy in range(k2):
        for dx in range(k2):
            t = dy * k2 + dx
            s = (dy - pad2) * W + (dx - pad2)                   # flattened tap offset
            r = M if s == 0 else pltpu.roll(M, (-s) % HW, axis=1)   # out[i] = M[i + s]
            acc = acc + wm_ref[t] * r                           # weight & border mask pre-folded

    for b in range(Bblk):
        v = acc[b:b + 1, :] + acc[Bblk + b:Bblk + b + 1, :]     # max part + mean part, (1, HW)
        sa = jax.nn.sigmoid(v)
        o_ref[b] = (xc_list[b] * sa).astype(o_ref.dtype)        # broadcast over channels (sublanes)


def cbam_forward(x, w_channel, w_spatial):
    """x: (B, C, H, W); w_channel: (k1,) Conv1d(1,1,k1) weight; w_spatial: (1, 2, k2, k2)."""
    B, C, H, W = x.shape
    k1 = int(w_channel.shape[0])
    k2 = int(w_spatial.shape[-1])
    pad2 = (k2 - 1) // 2
    HW = H * W

    Bblk = _pick_bblk(B, C, HW, x.dtype.itemsize)
    nblk = B // Bblk

    x2 = x.reshape(B, C, HW)                                    # lane-dense layout for the kernel

    # Pre-fold the spatial conv weights with the zero-padding border masks:
    # wm[t, r, p] = w_spatial[0, max-or-mean, dy, dx] * (neighbor of pixel p at tap t is in-bounds)
    pix = jnp.arange(HW, dtype=jnp.int32)
    colp, rowp = pix % W, pix // W
    w_sp = w_spatial.reshape(2, k2, k2).astype(jnp.float32)     # ch 0 -> max map, ch 1 -> mean map
    taps = []
    for dy in range(k2):
        offy = dy - pad2
        for dx in range(k2):
            offx = dx - pad2
            valid = ((colp + offx >= 0) & (colp + offx < W) &
                     (rowp + offy >= 0) & (rowp + offy < H)).astype(jnp.float32)       # (HW,)
            per_row = jnp.repeat(jnp.stack([w_sp[0, dy, dx], w_sp[1, dy, dx]]), Bblk)  # (2*Bblk,)
            taps.append(per_row[:, None] * valid[None, :])      # (2*Bblk, HW)
    wm = jnp.stack(taps, axis=0)                                # (k2*k2, 2*Bblk, HW)

    block_bytes = Bblk * C * HW * x.dtype.itemsize
    vmem_limit = int(min(64 * 2 ** 20,
                         max(16 * 2 ** 20, 4 * block_bytes + 2 * wm.size * 4 + (2 << 20))))

    kernel = functools.partial(_cbam_kernel, k1=k1, k2=k2, H=H, W=W, Bblk=Bblk)
    grid_spec = pltpu.PrefetchScalarGridSpec(
        num_scalar_prefetch=1,                                  # w_channel -> SMEM
        grid=(nblk,),                                           # Bblk independent samples per step
        in_specs=[
            pl.BlockSpec((k2 * k2, 2 * Bblk, HW), lambda g, w1: (0, 0, 0)),
            pl.BlockSpec((Bblk, C, HW), lambda g, w1: (g, 0, 0)),
        ],
        out_specs=pl.BlockSpec((Bblk, C, HW), lambda g, w1: (g, 0, 0)),
    )
    out2 = pl.pallas_call(
        kernel,
        out_shape=jax.ShapeDtypeStruct((B, C, HW), x.dtype),
        grid_spec=grid_spec,
        compiler_params=pltpu.CompilerParams(
            dimension_semantics=("parallel",),                  # sample blocks are independent
            vmem_limit_bytes=vmem_limit,
        ),
    )(w_channel.astype(jnp.float32), wm, x2)
    return out2.reshape(B, C, H, W)


def cbam_reference(x, w_channel, w_spatial):
    """Pure-JAX reference matching the PyTorch CBAMBlock forward semantics."""
    B, C, H, W = x.shape
    k1 = w_channel.shape[0]
    pad1 = (k1 - 1) // 2
    k2 = w_spatial.shape[-1]
    pad2 = (k2 - 1) // 2

    avg_p = jnp.mean(x, axis=(2, 3))
    max_p = jnp.max(x, axis=(2, 3))

    def conv1d(y):                                              # y: (B, C)
        yp = jnp.pad(y, ((0, 0), (pad1, pad1)))
        return sum(w_channel[t] * yp[:, t:t + C] for t in range(k1))

    ca = jax.nn.sigmoid(conv1d(avg_p) + conv1d(max_p))
    xc = x * ca[:, :, None, None]

    max_m = jnp.max(xc, axis=1, keepdims=True)
    mean_m = jnp.mean(xc, axis=1, keepdims=True)
    m = jnp.concatenate([max_m, mean_m], axis=1)                # (B, 2, H, W)
    mp = jnp.pad(m, ((0, 0), (0, 0), (pad2, pad2), (pad2, pad2)))
    v = jnp.zeros((B, 1, H, W), x.dtype)
    for ci in range(2):
        for dy in range(k2):
            for dx in range(k2):
                v = v + w_spatial[0, ci, dy, dx] * mp[:, ci:ci + 1, dy:dy + H, dx:dx + W]
    return xc * jax.nn.sigmoid(v)


if __name__ == "__main__":
    B, C, H, W = 2, 16, 16, 16
    spatial_k = 5
    k1 = _eca_kernel_size(C)                                    # C=16 -> kernel_size 3

    key = jax.random.PRNGKey(0)
    kx, kw1, kw2 = jax.random.split(key, 3)
    x = jax.random.normal(kx, (B, C, H, W), dtype=jnp.float32)
    # Conv1d(1, 1, k1, bias=False) weight and Conv2d(2, 1, (k,k), bias=False) weight.
    w_channel = 0.5 * jax.random.normal(kw1, (k1,), dtype=jnp.float32)
    w_spatial = 0.2 * jax.random.normal(kw2, (1, 2, spatial_k, spatial_k), dtype=jnp.float32)

    out = jax.block_until_ready(cbam_forward(x, w_channel, w_spatial))
    ref = cbam_reference(x, w_channel, w_spatial)

    assert out.shape == x.shape and out.dtype == x.dtype
    assert jnp.allclose(out, ref, atol=1e-5, rtol=1e-5), float(jnp.max(jnp.abs(out - ref)))
    print("KERNEL_OK")
</pallas_src>

<mosaic_0001>
module attributes {stable_mosaic.version = 11 : i64} {
  func.func @_cbam_kernel(%arg0: i32, %arg1: memref<3xf32, #tpu.memory_space<smem>>, %arg2: memref<25x2x256xf32, #tpu.memory_space<vmem>>, %arg3: memref<1x16x256xf32, #tpu.memory_space<vmem>>, %arg4: memref<1x16x256xf32, #tpu.memory_space<vmem>>) attributes {dimension_semantics = [#tpu.dimension_semantics<parallel>], iteration_bounds = array<i64: 2>, scalar_prefetch = 1 : i64, scratch_operands = 0 : i64, tpu.core_type = #tpu.core_type<tc>, window_params = [{pipeline_mode = #tpu.pipeline_mode<synchronous>, transform_indices = @transform_0, window_bounds = array<i64: 25, 2, 256>}, {transform_indices = @transform_1, window_bounds = array<i64: 1, 16, 256>}, {transform_indices = @transform_2, window_bounds = array<i64: 1, 16, 256>}]} {
    %c0 = arith.constant 0 : index
    %c0_0 = arith.constant 0 : index
    %c0_1 = arith.constant 0 : index
    %0 = vector.load %arg3[%c0, %c0_0, %c0_1] : memref<1x16x256xf32, #tpu.memory_space<vmem>>, vector<1x16x256xf32>
    %1 = vector.shape_cast %0 : vector<1x16x256xf32> to vector<16x256xf32>
    %cst = arith.constant dense<0.000000e+00> : vector<16xf32>
    %2 = vector.multi_reduction <add>, %1, %cst [1] : vector<16x256xf32> to vector<16xf32>
    %3 = vector.shape_cast %2 : vector<16xf32> to vector<16x1xf32>
    %cst_2 = arith.constant 3.906250e-03 : f32
    %4 = vector.broadcast %cst_2 : f32 to vector<16x1xf32>
    %5 = arith.mulf %3, %4 : vector<16x1xf32>
    %cst_3 = arith.constant dense<0xFF800000> : vector<16xf32>
    %6 = vector.multi_reduction <maximumf>, %1, %cst_3 [1] : vector<16x256xf32> to vector<16xf32>
    %7 = vector.shape_cast %6 : vector<16xf32> to vector<16x1xf32>
    %8 = arith.addf %5, %7 : vector<16x1xf32>
    %cst_4 = arith.constant 0.000000e+00 : f32
    %9 = vector.broadcast %cst_4 : f32 to vector<1x1xf32>
    %10 = tpu.concatenate %9, %8, %9 in 0 : vector<1x1xf32>, vector<16x1xf32>, vector<1x1xf32> -> vector<18x1xf32>
    %cst_5 = arith.constant 0.000000e+00 : f32
    %11 = vector.broadcast %cst_5 : f32 to vector<16x1xf32>
    %c0_6 = arith.constant 0 : index
    %12 = memref.load %arg1[%c0_6] : memref<3xf32, #tpu.memory_space<smem>>
    %13 = vector.extract_strided_slice %10 {offsets = [0, 0], sizes = [16, 1], strides = [1, 1]} : vector<18x1xf32> to vector<16x1xf32>
    %14 = vector.broadcast %12 : f32 to vector<16x1xf32>
    %15 = arith.mulf %14, %13 : vector<16x1xf32>
    %16 = arith.addf %11, %15 : vector<16x1xf32>
    %c1 = arith.constant 1 : index
    %17 = memref.load %arg1[%c1] : memref<3xf32, #tpu.memory_space<smem>>
    %18 = vector.extract_strided_slice %10 {offsets = [1, 0], sizes = [16, 1], strides = [1, 1]} : vector<18x1xf32> to vector<16x1xf32>
    %19 = vector.broadcast %17 : f32 to vector<16x1xf32>
    %20 = arith.mulf %19, %18 : vector<16x1xf32>
    %21 = arith.addf %16, %20 : vector<16x1xf32>
    %c2 = arith.constant 2 : index
    %22 = memref.load %arg1[%c2] : memref<3xf32, #tpu.memory_space<smem>>
    %23 = vector.extract_strided_slice %10 {offsets = [2, 0], sizes = [16, 1], strides = [1, 1]} : vector<18x1xf32> to vector<16x1xf32>
    %24 = vector.broadcast %22 : f32 to vector<16x1xf32>
    %25 = arith.mulf %24, %23 : vector<16x1xf32>
    %26 = arith.addf %21, %25 : vector<16x1xf32>
    %27 = arith.negf %26 : vector<16x1xf32>
    %28 = math.exp %27 : vector<16x1xf32>
    %cst_7 = arith.constant 1.000000e+00 : f32
    %29 = vector.broadcast %cst_7 : f32 to vector<16x1xf32>
    %30 = arith.addf %29, %28 : vector<16x1xf32>
    %31 = arith.divf %29, %30 : vector<16x1xf32>
    %32 = vector.broadcast %31 : vector<16x1xf32> to vector<16x256xf32>
    %33 = arith.mulf %1, %32 : vector<16x256xf32>
    %cst_8 = arith.constant dense<0xFF800000> : vector<256xf32>
    %34 = vector.multi_reduction <maximumf>, %33, %cst_8 [0] : vector<16x256xf32> to vector<256xf32>
    %35 = vector.shape_cast %34 : vector<256xf32> to vector<1x256xf32>
    %cst_9 = arith.constant dense<0.000000e+00> : vector<256xf32>
    %36 = vector.multi_reduction <add>, %33, %cst_9 [0] : vector<16x256xf32> to vector<256xf32>
    %37 = vector.shape_cast %36 : vector<256xf32> to vector<1x256xf32>
    %cst_10 = arith.constant 6.250000e-02 : f32
    %38 = vector.broadcast %cst_10 : f32 to vector<1x256xf32>
    %39 = arith.mulf %37, %38 : vector<1x256xf32>
    %40 = tpu.concatenate %35, %39 in 0 : vector<1x256xf32>, vector<1x256xf32> -> vector<2x256xf32>
    %cst_11 = arith.constant 0.000000e+00 : f32
    %41 = vector.broadcast %cst_11 : f32 to vector<2x256xf32>
    %c34_i32 = arith.constant 34 : i32
    %42 = tpu.dynamic_rotate %40 by %c34_i32 dim 1 : vector<2x256xf32>, i32 -> vector<2x256xf32>
    %c0_12 = arith.constant 0 : index
    %c0_13 = arith.constant 0 : index
    %c0_14 = arith.constant 0 : index
    %43 = vector.load %arg2[%c0_12, %c0_13, %c0_14] : memref<25x2x256xf32, #tpu.memory_space<vmem>>, vector<1x2x256xf32>
    %44 = vector.shape_cast %43 : vector<1x2x256xf32> to vector<2x256xf32>
    %45 = arith.mulf %44, %42 : vector<2x256xf32>
    %46 = arith.addf %41, %45 : vector<2x256xf32>
    %c33_i32 = arith.constant 33 : i32
    %47 = tpu.dynamic_rotate %40 by %c33_i32 dim 1 : vector<2x256xf32>, i32 -> vector<2x256xf32>
    %c1_15 = arith.constant 1 : index
    %c0_16 = arith.constant 0 : index
    %c0_17 = arith.constant 0 : index
    %48 = vector.load %arg2[%c1_15, %c0_16, %c0_17] : memref<25x2x256xf32, #tpu.memory_space<vmem>>, vector<1x2x256xf32>
    %49 = vector.shape_cast %48 : vector<1x2x256xf32> to vector<2x256xf32>
    %50 = arith.mulf %49, %47 : vector<2x256xf32>
    %51 = arith.addf %46, %50 : vector<2x256xf32>
    %c32_i32 = arith.constant 32 : i32
    %52 = tpu.dynamic_rotate %40 by %c32_i32 dim 1 : vector<2x256xf32>, i32 -> vector<2x256xf32>
    %c2_18 = arith.constant 2 : index
    %c0_19 = arith.constant 0 : index
    %c0_20 = arith.constant 0 : index
    %53 = vector.load %arg2[%c2_18, %c0_19, %c0_20] : memref<25x2x256xf32, #tpu.memory_space<vmem>>, vector<1x2x256xf32>
    %54 = vector.shape_cast %53 : vector<1x2x256xf32> to vector<2x256xf32>
    %55 = arith.mulf %54, %52 : vector<2x256xf32>
    %56 = arith.addf %51, %55 : vector<2x256xf32>
    %c31_i32 = arith.constant 31 : i32
    %57 = tpu.dynamic_rotate %40 by %c31_i32 dim 1 : vector<2x256xf32>, i32 -> vector<2x256xf32>
    %c3 = arith.constant 3 : index
    %c0_21 = arith.constant 0 : index
    %c0_22 = arith.constant 0 : index
    %58 = vector.load %arg2[%c3, %c0_21, %c0_22] : memref<25x2x256xf32, #tpu.memory_space<vmem>>, vector<1x2x256xf32>
    %59 = vector.shape_cast %58 : vector<1x2x256xf32> to vector<2x256xf32>
    %60 = arith.mulf %59, %57 : vector<2x256xf32>
    %61 = arith.addf %56, %60 : vector<2x256xf32>
    %c30_i32 = arith.constant 30 : i32
    %62 = tpu.dynamic_rotate %40 by %c30_i32 dim 1 : vector<2x256xf32>, i32 -> vector<2x256xf32>
    %c4 = arith.constant 4 : index
    %c0_23 = arith.constant 0 : index
    %c0_24 = arith.constant 0 : index
    %63 = vector.load %arg2[%c4, %c0_23, %c0_24] : memref<25x2x256xf32, #tpu.memory_space<vmem>>, vector<1x2x256xf32>
    %64 = vector.shape_cast %63 : vector<1x2x256xf32> to vector<2x256xf32>
    %65 = arith.mulf %64, %62 : vector<2x256xf32>
    %66 = arith.addf %61, %65 : vector<2x256xf32>
    %c18_i32 = arith.constant 18 : i32
    %67 = tpu.dynamic_rotate %40 by %c18_i32 dim 1 : vector<2x256xf32>, i32 -> vector<2x256xf32>
    %c5 = arith.constant 5 : index
    %c0_25 = arith.constant 0 : index
    %c0_26 = arith.constant 0 : index
    %68 = vector.load %arg2[%c5, %c0_25, %c0_26] : memref<25x2x256xf32, #tpu.memory_space<vmem>>, vector<1x2x256xf32>
    %69 = vector.shape_cast %68 : vector<1x2x256xf32> to vector<2x256xf32>
    %70 = arith.mulf %69, %67 : vector<2x256xf32>
    %71 = arith.addf %66, %70 : vector<2x256xf32>
    %c17_i32 = arith.constant 17 : i32
    %72 = tpu.dynamic_rotate %40 by %c17_i32 dim 1 : vector<2x256xf32>, i32 -> vector<2x256xf32>
    %c6 = arith.constant 6 : index
    %c0_27 = arith.constant 0 : index
    %c0_28 = arith.constant 0 : index
    %73 = vector.load %arg2[%c6, %c0_27, %c0_28] : memref<25x2x256xf32, #tpu.memory_space<vmem>>, vector<1x2x256xf32>
    %74 = vector.shape_cast %73 : vector<1x2x256xf32> to vector<2x256xf32>
    %75 = arith.mulf %74, %72 : vector<2x256xf32>
    %76 = arith.addf %71, %75 : vector<2x256xf32>
    %c16_i32 = arith.constant 16 : i32
    %77 = tpu.dynamic_rotate %40 by %c16_i32 dim 1 : vector<2x256xf32>, i32 -> vector<2x256xf32>
    %c7 = arith.constant 7 : index
    %c0_29 = arith.constant 0 : index
    %c0_30 = arith.constant 0 : index
    %78 = vector.load %arg2[%c7, %c0_29, %c0_30] : memref<25x2x256xf32, #tpu.memory_space<vmem>>, vector<1x2x256xf32>
    %79 = vector.shape_cast %78 : vector<1x2x256xf32> to vector<2x256xf32>
    %80 = arith.mulf %79, %77 : vector<2x256xf32>
    %81 = arith.addf %76, %80 : vector<2x256xf32>
    %c15_i32 = arith.constant 15 : i32
    %82 = tpu.dynamic_rotate %40 by %c15_i32 dim 1 : vector<2x256xf32>, i32 -> vector<2x256xf32>
    %c8 = arith.constant 8 : index
    %c0_31 = arith.constant 0 : index
    %c0_32 = arith.constant 0 : index
    %83 = vector.load %arg2[%c8, %c0_31, %c0_32] : memref<25x2x256xf32, #tpu.memory_space<vmem>>, vector<1x2x256xf32>
    %84 = vector.shape_cast %83 : vector<1x2x256xf32> to vector<2x256xf32>
    %85 = arith.mulf %84, %82 : vector<2x256xf32>
    %86 = arith.addf %81, %85 : vector<2x256xf32>
    %c14_i32 = arith.constant 14 : i32
    %87 = tpu.dynamic_rotate %40 by %c14_i32 dim 1 : vector<2x256xf32>, i32 -> vector<2x256xf32>
    %c9 = arith.constant 9 : index
    %c0_33 = arith.constant 0 : index
    %c0_34 = arith.constant 0 : index
    %88 = vector.load %arg2[%c9, %c0_33, %c0_34] : memref<25x2x256xf32, #tpu.memory_space<vmem>>, vector<1x2x256xf32>
    %89 = vector.shape_cast %88 : vector<1x2x256xf32> to vector<2x256xf32>
    %90 = arith.mulf %89, %87 : vector<2x256xf32>
    %91 = arith.addf %86, %90 : vector<2x256xf32>
    %c2_i32 = arith.constant 2 : i32
    %92 = tpu.dynamic_rotate %40 by %c2_i32 dim 1 : vector<2x256xf32>, i32 -> vector<2x256xf32>
    %c10 = arith.constant 10 : index
    %c0_35 = arith.constant 0 : index
    %c0_36 = arith.constant 0 : index
    %93 = vector.load %arg2[%c10, %c0_35, %c0_36] : memref<25x2x256xf32, #tpu.memory_space<vmem>>, vector<1x2x256xf32>
    %94 = vector.shape_cast %93 : vector<1x2x256xf32> to vector<2x256xf32>
    %95 = arith.mulf %94, %92 : vector<2x256xf32>
    %96 = arith.addf %91, %95 : vector<2x256xf32>
    %c1_i32 = arith.constant 1 : i32
    %97 = tpu.dynamic_rotate %40 by %c1_i32 dim 1 : vector<2x256xf32>, i32 -> vector<2x256xf32>
    %c11 = arith.constant 11 : index
    %c0_37 = arith.constant 0 : index
    %c0_38 = arith.constant 0 : index
    %98 = vector.load %arg2[%c11, %c0_37, %c0_38] : memref<25x2x256xf32, #tpu.memory_space<vmem>>, vector<1x2x256xf32>
    %99 = vector.shape_cast %98 : vector<1x2x256xf32> to vector<2x256xf32>
    %100 = arith.mulf %99, %97 : vector<2x256xf32>
    %101 = arith.addf %96, %100 : vector<2x256xf32>
    %c12 = arith.constant 12 : index
    %c0_39 = arith.constant 0 : index
    %c0_40 = arith.constant 0 : index
    %102 = vector.load %arg2[%c12, %c0_39, %c0_40] : memref<25x2x256xf32, #tpu.memory_space<vmem>>, vector<1x2x256xf32>
    %103 = vector.shape_cast %102 : vector<1x2x256xf32> to vector<2x256xf32>
    %104 = arith.mulf %103, %40 : vector<2x256xf32>
    %105 = arith.addf %101, %104 : vector<2x256xf32>
    %c255_i32 = arith.constant 255 : i32
    %106 = tpu.dynamic_rotate %40 by %c255_i32 dim 1 : vector<2x256xf32>, i32 -> vector<2x256xf32>
    %c13 = arith.constant 13 : index
    %c0_41 = arith.constant 0 : index
    %c0_42 = arith.constant 0 : index
    %107 = vector.load %arg2[%c13, %c0_41, %c0_42] : memref<25x2x256xf32, #tpu.memory_space<vmem>>, vector<1x2x256xf32>
    %108 = vector.shape_cast %107 : vector<1x2x256xf32> to vector<2x256xf32>
    %109 = arith.mulf %108, %106 : vector<2x256xf32>
    %110 = arith.addf %105, %109 : vector<2x256xf32>
    %c254_i32 = arith.constant 254 : i32
    %111 = tpu.dynamic_rotate %40 by %c254_i32 dim 1 : vector<2x256xf32>, i32 -> vector<2x256xf32>
    %c14 = arith.constant 14 : index
    %c0_43 = arith.constant 0 : index
    %c0_44 = arith.constant 0 : index
    %112 = vector.load %arg2[%c14, %c0_43, %c0_44] : memref<25x2x256xf32, #tpu.memory_space<vmem>>, vector<1x2x256xf32>
    %113 = vector.shape_cast %112 : vector<1x2x256xf32> to vector<2x256xf32>
    %114 = arith.mulf %113, %111 : vector<2x256xf32>
    %115 = arith.addf %110, %114 : vector<2x256xf32>
    %c242_i32 = arith.constant 242 : i32
    %116 = tpu.dynamic_rotate %40 by %c242_i32 dim 1 : vector<2x256xf32>, i32 -> vector<2x256xf32>
    %c15 = arith.constant 15 : index
    %c0_45 = arith.constant 0 : index
    %c0_46 = arith.constant 0 : index
    %117 = vector.load %arg2[%c15, %c0_45, %c0_46] : memref<25x2x256xf32, #tpu.memory_space<vmem>>, vector<1x2x256xf32>
    %118 = vector.shape_cast %117 : vector<1x2x256xf32> to vector<2x256xf32>
    %119 = arith.mulf %118, %116 : vector<2x256xf32>
    %120 = arith.addf %115, %119 : vector<2x256xf32>
    %c241_i32 = arith.constant 241 : i32
    %121 = tpu.dynamic_rotate %40 by %c241_i32 dim 1 : vector<2x256xf32>, i32 -> vector<2x256xf32>
    %c16 = arith.constant 16 : index
    %c0_47 = arith.constant 0 : index
    %c0_48 = arith.constant 0 : index
    %122 = vector.load %arg2[%c16, %c0_47, %c0_48] : memref<25x2x256xf32, #tpu.memory_space<vmem>>, vector<1x2x256xf32>
    %123 = vector.shape_cast %122 : vector<1x2x256xf32> to vector<2x256xf32>
    %124 = arith.mulf %123, %121 : vector<2x256xf32>
    %125 = arith.addf %120, %124 : vector<2x256xf32>
    %c240_i32 = arith.constant 240 : i32
    %126 = tpu.dynamic_rotate %40 by %c240_i32 dim 1 : vector<2x256xf32>, i32 -> vector<2x256xf32>
    %c17 = arith.constant 17 : index
    %c0_49 = arith.constant 0 : index
    %c0_50 = arith.constant 0 : index
    %127 = vector.load %arg2[%c17, %c0_49, %c0_50] : memref<25x2x256xf32, #tpu.memory_space<vmem>>, vector<1x2x256xf32>
    %128 = vector.shape_cast %127 : vector<1x2x256xf32> to vector<2x256xf32>
    %129 = arith.mulf %128, %126 : vector<2x256xf32>
    %130 = arith.addf %125, %129 : vector<2x256xf32>
    %c239_i32 = arith.constant 239 : i32
    %131 = tpu.dynamic_rotate %40 by %c239_i32 dim 1 : vector<2x256xf32>, i32 -> vector<2x256xf32>
    %c18 = arith.constant 18 : index
    %c0_51 = arith.constant 0 : index
    %c0_52 = arith.constant 0 : index
    %132 = vector.load %arg2[%c18, %c0_51, %c0_52] : memref<25x2x256xf32, #tpu.memory_space<vmem>>, vector<1x2x256xf32>
    %133 = vector.shape_cast %132 : vector<1x2x256xf32> to vector<2x256xf32>
    %134 = arith.mulf %133, %131 : vector<2x256xf32>
    %135 = arith.addf %130, %134 : vector<2x256xf32>
    %c238_i32 = arith.constant 238 : i32
    %136 = tpu.dynamic_rotate %40 by %c238_i32 dim 1 : vector<2x256xf32>, i32 -> vector<2x256xf32>
    %c19 = arith.constant 19 : index
    %c0_53 = arith.constant 0 : index
    %c0_54 = arith.constant 0 : index
    %137 = vector.load %arg2[%c19, %c0_53, %c0_54] : memref<25x2x256xf32, #tpu.memory_space<vmem>>, vector<1x2x256xf32>
    %138 = vector.shape_cast %137 : vector<1x2x256xf32> to vector<2x256xf32>
    %139 = arith.mulf %138, %136 : vector<2x256xf32>
    %140 = arith.addf %135, %139 : vector<2x256xf32>
    %c226_i32 = arith.constant 226 : i32
    %141 = tpu.dynamic_rotate %40 by %c226_i32 dim 1 : vector<2x256xf32>, i32 -> vector<2x256xf32>
    %c20 = arith.constant 20 : index
    %c0_55 = arith.constant 0 : index
    %c0_56 = arith.constant 0 : index
    %142 = vector.load %arg2[%c20, %c0_55, %c0_56] : memref<25x2x256xf32, #tpu.memory_space<vmem>>, vector<1x2x256xf32>
    %143 = vector.shape_cast %142 : vector<1x2x256xf32> to vector<2x256xf32>
    %144 = arith.mulf %143, %141 : vector<2x256xf32>
    %145 = arith.addf %140, %144 : vector<2x256xf32>
    %c225_i32 = arith.constant 225 : i32
    %146 = tpu.dynamic_rotate %40 by %c225_i32 dim 1 : vector<2x256xf32>, i32 -> vector<2x256xf32>
    %c21 = arith.constant 21 : index
    %c0_57 = arith.constant 0 : index
    %c0_58 = arith.constant 0 : index
    %147 = vector.load %arg2[%c21, %c0_57, %c0_58] : memref<25x2x256xf32, #tpu.memory_space<vmem>>, vector<1x2x256xf32>
    %148 = vector.shape_cast %147 : vector<1x2x256xf32> to vector<2x256xf32>
    %149 = arith.mulf %148, %146 : vector<2x256xf32>
    %150 = arith.addf %145, %149 : vector<2x256xf32>
    %c224_i32 = arith.constant 224 : i32
    %151 = tpu.dynamic_rotate %40 by %c224_i32 dim 1 : vector<2x256xf32>, i32 -> vector<2x256xf32>
    %c22 = arith.constant 22 : index
    %c0_59 = arith.constant 0 : index
    %c0_60 = arith.constant 0 : index
    %152 = vector.load %arg2[%c22, %c0_59, %c0_60] : memref<25x2x256xf32, #tpu.memory_space<vmem>>, vector<1x2x256xf32>
    %153 = vector.shape_cast %152 : vector<1x2x256xf32> to vector<2x256xf32>
    %154 = arith.mulf %153, %151 : vector<2x256xf32>
    %155 = arith.addf %150, %154 : vector<2x256xf32>
    %c223_i32 = arith.constant 223 : i32
    %156 = tpu.dynamic_rotate %40 by %c223_i32 dim 1 : vector<2x256xf32>, i32 -> vector<2x256xf32>
    %c23 = arith.constant 23 : index
    %c0_61 = arith.constant 0 : index
    %c0_62 = arith.constant 0 : index
    %157 = vector.load %arg2[%c23, %c0_61, %c0_62] : memref<25x2x256xf32, #tpu.memory_space<vmem>>, vector<1x2x256xf32>
    %158 = vector.shape_cast %157 : vector<1x2x256xf32> to vector<2x256xf32>
    %159 = arith.mulf %158, %156 : vector<2x256xf32>
    %160 = arith.addf %155, %159 : vector<2x256xf32>
    %c222_i32 = arith.constant 222 : i32
    %161 = tpu.dynamic_rotate %40 by %c222_i32 dim 1 : vector<2x256xf32>, i32 -> vector<2x256xf32>
    %c24 = arith.constant 24 : index
    %c0_63 = arith.constant 0 : index
    %c0_64 = arith.constant 0 : index
    %162 = vector.load %arg2[%c24, %c0_63, %c0_64] : memref<25x2x256xf32, #tpu.memory_space<vmem>>, vector<1x2x256xf32>
    %163 = vector.shape_cast %162 : vector<1x2x256xf32> to vector<2x256xf32>
    %164 = arith.mulf %163, %161 : vector<2x256xf32>
    %165 = arith.addf %160, %164 : vector<2x256xf32>
    %166 = vector.extract_strided_slice %165 {offsets = [0, 0], sizes = [1, 256], strides = [1, 1]} : vector<2x256xf32> to vector<1x256xf32>
    %167 = vector.extract_strided_slice %165 {offsets = [1, 0], sizes = [1, 256], strides = [1, 1]} : vector<2x256xf32> to vector<1x256xf32>
    %168 = arith.addf %166, %167 : vector<1x256xf32>
    %169 = arith.negf %168 : vector<1x256xf32>
    %170 = math.exp %169 : vector<1x256xf32>
    %cst_65 = arith.constant 1.000000e+00 : f32
    %171 = vector.broadcast %cst_65 : f32 to vector<1x256xf32>
    %172 = arith.addf %171, %170 : vector<1x256xf32>
    %173 = arith.divf %171, %172 : vector<1x256xf32>
    %174 = vector.broadcast %173 : vector<1x256xf32> to vector<16x256xf32>
    %175 = arith.mulf %33, %174 : vector<16x256xf32>
    %c0_66 = arith.constant 0 : index
    %c0_67 = arith.constant 0 : index
    %c0_68 = arith.constant 0 : index
    %176 = vector.load %arg4[%c0_66, %c0_67, %c0_68] : memref<1x16x256xf32, #tpu.memory_space<vmem>>, vector<1x16x256xf32>
    %177 = vector.shape_cast %176 : vector<1x16x256xf32> to vector<16x256xf32>
    %178 = vector.shape_cast %175 : vector<16x256xf32> to vector<1x16x256xf32>
    tpu.vector_store %arg4[%c0_66, %c0_67, %c0_68], %178 {strides = array<i32>} : memref<1x16x256xf32, #tpu.memory_space<vmem>>, vector<1x16x256xf32>,
    return
  }
  func.func @transform_0(%arg0: i32, %arg1: memref<3xf32, #tpu.memory_space<smem>>) -> (i32, i32, i32) {
    %c0_i32 = arith.constant 0 : i32
    %c0_i32_0 = arith.constant 0 : i32
    %c0_i32_1 = arith.constant 0 : i32
    %c0_i32_2 = arith.constant 0 : i32
    return %c0_i32, %c0_i32_0, %c0_i32_1 : i32, i32, i32
  }
  func.func @transform_1(%arg0: i32, %arg1: memref<3xf32, #tpu.memory_space<smem>>) -> (i32, i32, i32) {
    %c0_i32 = arith.constant 0 : i32
    %c0_i32_0 = arith.constant 0 : i32
    %c0_i32_1 = arith.constant 0 : i32
    return %arg0, %c0_i32, %c0_i32_0 : i32, i32, i32
  }
  func.func @transform_2(%arg0: i32, %arg1: memref<3xf32, #tpu.memory_space<smem>>) -> (i32, i32, i32) {
    %c0_i32 = arith.constant 0 : i32
    %c0_i32_0 = arith.constant 0 : i32
    %c0_i32_1 = arith.constant 0 : i32
    return %arg0, %c0_i32, %c0_i32_0 : i32, i32, i32
  }
}

</mosaic_0001>

<llo_original>
// kernel: tpu_custom_call.1
$region0: #{tpu_custom_call.1}
  #allocation0 [shape = 'u32[]', space=smem, size = 0x4, offset = 0x4, fixed_abs, tag = 'smem constant byte address 0x4 - core index']
  #allocation1 [shape = 'u32[144,128]{1,0:T(1,128)}', space=vmem, size = 0x12000, scoped, tag = 'internal scratch']
  #allocation2 [shape = 's32[1]{0}', space=sflag, size = 0x4, scoped, tag = 'scoped memory for tpu_custom_call.1']
  #allocation3 [shape = 'u8[512]{0}', space=smem, size = 0x200, scoped, tag = 'prefetched SMEM operand 0']
  %s0 = inlined_call_operand.hbm [shape: f32[3], index: 0, kind: input, shape index: {}]
  %s1 = inlined_call_operand.hbm [shape: f32[25,2,256], index: 1, kind: input, shape index: {}]
  %s2 = inlined_call_operand.hbm [shape: f32[2,16,256], index: 2, kind: input, shape index: {}]
  %s3 = inlined_call_operand.hbm [shape: f32[2,16,256], index: 3, kind: output, shape index: {}]
  %s4 = sld [smem:[#allocation0]]
  $region49: #{tpu_custom_call.1} parent=0
    _
  %s6 = ssub.s32 1, %s4
  %s7 = scalar_select 0, %s6, %s4
  %9 = dma.hbm_to_smem %s0, 16, [#allocation3], [#allocation2]
  %10 = dma.done [#allocation2], 16
  %11 = sfence
  $region1: #{tpu_custom_call.1} parent=0
    #allocation4 [shape = 'u8[51200]{0}', space=vmem, size = 0xc800, scoped, tag = 'input window, operand 1, single buffered']
    #allocation5 [shape = 's32[2]{0}', space=sflag, size = 0x8, scoped, tag = 'scoped memory for tpu_custom_call.1']
    #allocation6 [shape = 's32[2]{0}', space=sflag, size = 0x8, scoped, tag = 'scoped memory for tpu_custom_call.1']
    #allocation7 [shape = 'u8[32768]{0}', space=vmem, size = 0x8000, scoped, tag = 'input window, operand 2']
    #allocation8 [shape = 's32[2]{0}', space=sflag, size = 0x8, scoped, tag = 'scoped memory for tpu_custom_call.1']
    #allocation9 [shape = 'u8[32768]{0}', space=vmem, size = 0x8000, scoped, tag = 'output window, operand 0']
    %12 = vsyncpa [#allocation5], 0
    %13 = vsyncpa [#allocation8], 0
    %s14 = scalar_lea.sflag [#allocation8], 1
    %15 = vsyncpa %s14, 0
    %16 = vsyncpa [#allocation6], 0
    %s17 = scalar_lea.sflag [#allocation6], 1
    %18 = vsyncpa %s17, 0
    loop: start=0, step=1, limit=4
    $region2: #{tpu_custom_call.1} parent=1 // loop_pre_header
      _
    $region3: #{tpu_custom_call.1} parent=1 // loop_header
      %s20 = sphi 0, %s24
      %p21 = scmp.ge.s32.totalorder %s20, 4
      %s28 = sphi 0, %s28
      %s30 = sphi 0, %s28
      %s31 = sphi 0, %s30
      %s45 = sphi 0, %s31
      %s51 = sphi 0, %s53
      %s54 = sphi 0, %s51
      %s55 = sphi 0, %s54
      %s71 = sphi 0, %s55
      %s77 = sphi 0, %s79
      %s80 = sphi 0, %s77
      %s81 = sphi 0, %s80
      %s97 = sphi 0, %s81
    $region4: #{tpu_custom_call.1} parent=1 // loop_header_branch
      %23 = sbr.rel (%p21) target = $region8
    $region5: #{tpu_custom_call.1} parent=1 // loop_body
      %s25 = ssub.s32 %s20, 1
      %s26 = ssub.s32 %s20, 2
      %s27 = sadd.s32 %s20, 1
      %s29 = sadd.s32 %s28, 1
      %p32 = scmp.eq.s32.totalorder %s20, 1
      %p33 = scmp.ne.s32.totalorder %s28, %s30
      %p34 = scmp.eq.s32.totalorder %s20, 0
      %p35 = por %p33, %p34
      %p36 = scmp.ne.s32.totalorder %s28, %s30
      %p37 = scmp.eq.s32.totalorder %s25, 1
      %p38 = por %p36, %p37
      %p39 = scmp.ne.s32.totalorder %s30, %s31
      %p40 = scmp.eq.s32.totalorder %s25, 0
      %p41 = por %p39, %p40
      %p42 = scmp.ne.s32.totalorder %s30, %s31
      %p43 = scmp.eq.s32.totalorder %s26, 1
      %p44 = por %p42, %p43
      %p46 = scmp.ne.s32.totalorder %s31, %s45
      %p47 = scmp.eq.s32.totalorder %s26, 0
      %p48 = por %p46, %p47
      %s49 = ssub.s32 %s20, %s27
      %p50 = scmp.eq.s32.totalorder %s49, 0
      %s52 = sadd.s32 %s51, 1
      %s53 = scalar_select %p50, %s51, %s52
      %p56 = pneg %p50
      %p57 = scmp.eq.s32.totalorder %s20, 1
      %p58 = por %p56, %p57
      %p59 = scmp.ne.s32.totalorder %s51, %s54
      %p60 = scmp.eq.s32.totalorder %s20, 0
      %p61 = por %p59, %p60
      %p62 = scmp.ne.s32.totalorder %s51, %s54
      %p63 = scmp.eq.s32.totalorder %s25, 1
      %p64 = por %p62, %p63
      %p65 = scmp.ne.s32.totalorder %s54, %s55
      %p66 = scmp.eq.s32.totalorder %s25, 0
      %p67 = por %p65, %p66
      %p68 = scmp.ne.s32.totalorder %s54, %s55
      %p69 = scmp.eq.s32.totalorder %s26, 1
      %p70 = por %p68, %p69
      %p72 = scmp.ne.s32.totalorder %s55, %s71
      %p73 = scmp.eq.s32.totalorder %s26, 0
      %p74 = por %p72, %p73
      %s75 = ssub.s32 %s20, %s27
      %p76 = scmp.eq.s32.totalorder %s75, 0
      %s78 = sadd.s32 %s77, 1
      %s79 = scalar_select %p76, %s77, %s78
      %p82 = pneg %p76
      %p83 = scmp.eq.s32.totalorder %s20, 1
      %p84 = por %p82, %p83
      %p85 = scmp.ne.s32.totalorder %s77, %s80
      %p86 = scmp.eq.s32.totalorder %s20, 0
      %p87 = por %p85, %p86
      %p88 = scmp.ne.s32.totalorder %s77, %s80
      %p89 = scmp.eq.s32.totalorder %s25, 1
      %p90 = por %p88, %p89
      %p91 = scmp.ne.s32.totalorder %s80, %s81
      %p92 = scmp.eq.s32.totalorder %s25, 0
      %p93 = por %p91, %p92
      %p94 = scmp.ne.s32.totalorder %s80, %s81
      %p95 = scmp.eq.s32.totalorder %s26, 1
      %p96 = por %p94, %p95
      %p98 = scmp.ne.s32.totalorder %s81, %s97
      %p99 = scmp.eq.s32.totalorder %s26, 0
      %p100 = por %p98, %p99
      %p101 = scmp.le.s32.totalorder 1, %s20
      %p102 = scmp.lt.s32.totalorder %s20, 3
      %p103 = pnand %p101, %p102
      %p104 = pneg %p103
      // Predicated region
      $region9: #{tpu_custom_call.1} parent=5 // pred_check
        _
      $region10: #{tpu_custom_call.1} parent=5 // pred_check_branch
        %106 = sbr.rel (%p103) target = $region12
      $region11: #{tpu_custom_call.1} parent=5 // pred_region
        %s107 = ssub.s32 %s20, 1
        // Predicated region
        $region13: #{tpu_custom_call.1} parent=11 // pred_check
          %p108 = pneg %p41
        $region14: #{tpu_custom_call.1} parent=11 // pred_check_branch
          %110 = sbr.rel (%p108) target = $region16
        $region15: #{tpu_custom_call.1} parent=11 // pred_region
          %s112 = ssub.s32 1600, 1600
          %113 = vsyncadd [#allocation5], %s112
          %s114 = sshll.u32 [#allocation4], 4
          %s115 = int_to_ptr.vmem [resolvable:$true] %s114
          %120 = dma.hbm_to_vmem [thread:$0]  %s1, 1600, %s115, [#allocation5], 64, 64, 4
        $region16: #{tpu_custom_call.1} parent=11 // pred_fallthru
          _
      $region12: #{tpu_custom_call.1} parent=5 // pred_fallthru
        _
      %p121 = scmp.lt.s32.totalorder %s20, 2
      // Predicated region
      $region17: #{tpu_custom_call.1} parent=5 // pred_check
        %p122 = pneg %p121
      $region18: #{tpu_custom_call.1} parent=5 // pred_check_branch
        %124 = sbr.rel (%p122) target = $region20
      $region19: #{tpu_custom_call.1} parent=5 // pred_region
        // Predicated region
        $region21: #{tpu_custom_call.1} parent=19 // pred_check
          %p125 = pneg %p61
        $region22: #{tpu_custom_call.1} parent=19 // pred_check_branch
          %127 = sbr.rel (%p125) target = $region24
        $region23: #{tpu_custom_call.1} parent=19 // pred_region
          %s128 = sand.u32 %s51, 1
          %s129 = scalar_lea.sflag [#allocation8], %s128
          %s130 = sand.u32 %s51, 1
          %s131 = smul.addr %s130, 32
          %s132 = scalar_lea.vmem [#allocation7], %s131
          %s134 = ssub.s32 512, 512
          %135 = vsyncadd %s129, %s134
          %s136 = smul.addr %s20, 4
          %s137 = smul.addr %s136, 128
          %s138 = scalar_lea.hbm %s2, %s137
          %s139 = sshll.u32 %s132, 4
          %s140 = int_to_ptr.vmem [resolvable:$true] %s139
          %145 = dma.hbm_to_vmem [thread:$0]  %s138, 512, %s140, %s129, 256, 256, 16
        $region24: #{tpu_custom_call.1} parent=19 // pred_fallthru
          _
      $region20: #{tpu_custom_call.1} parent=5 // pred_fallthru
        _
      %p146 = scmp.le.s32.totalorder 1, %s20
      %p147 = scmp.lt.s32.totalorder %s20, 3
      %p148 = pnand %p146, %p147
      %p149 = pneg %p148
      // Predicated region
      $region25: #{tpu_custom_call.1} parent=5 // pred_check
        _
      $region26: #{tpu_custom_call.1} parent=5 // pred_check_branch
        %151 = sbr.rel (%p148) target = $region28
      $region27: #{tpu_custom_call.1} parent=5 // pred_region
        %s152 = ssub.s32 %s20, 1
        // Predicated region
        $region29: #{tpu_custom_call.1} parent=27 // pred_check
          %p153 = pneg %p41
        $region30: #{tpu_custom_call.1} parent=27 // pred_check_branch
          %155 = sbr.rel (%p153) target = $region32
        $region31: #{tpu_custom_call.1} parent=27 // pred_region
          %156 = dma.done [#allocation5], 1600
        $region32: #{tpu_custom_call.1} parent=27 // pred_fallthru
          _
        %s157 = sand.u32 %s54, 1
        %s158 = scalar_lea.sflag [#allocation8], %s157
        %s159 = sand.u32 %s54, 1
        %s160 = smul.addr %s159, 32
        %s161 = scalar_lea.vmem [#allocation7], %s160
        // Predicated region
        $region33: #{tpu_custom_call.1} parent=27 // pred_check
          %p162 = pneg %p67
        $region34: #{tpu_custom_call.1} parent=27 // pred_check_branch
          %164 = sbr.rel (%p162) target = $region36
        $region35: #{tpu_custom_call.1} parent=27 // pred_region
          %165 = dma.done %s158, 512
        $region36: #{tpu_custom_call.1} parent=27 // pred_fallthru
          _
        %p166 = pneg %p41
        %p167 = pneg %p38
        %s168 = sand.u32 %s54, 1
        %s169 = scalar_lea.sflag [#allocation8], %s168
        %s170 = sand.u32 %s54, 1
        %s171 = smul.addr %s170, 32
        %s172 = scalar_lea.vmem [#allocation7], %s171
        %p173 = pneg %p67
        %p174 = pneg %p64
        %p175 = pneg %p93
        %p176 = pneg %p90
        %s177 = sand.u32 %s80, 1
        %s178 = scalar_lea.sflag [#allocation6], %s177
        %s179 = sand.u32 %s80, 1
        %s180 = smul.addr %s179, 32
        %s181 = scalar_lea.vmem [#allocation9], %s180
        %v182 = vld [vmem:[%s161] sm:$0xff]
        %v183 = vld [vmem:[%s161 + $0x8] sm:$0xff]
        %v184 = vld [vmem:[%s161 + $0x10] sm:$0xff]
        %v185 = vld [vmem:[%s161 + $0x18] sm:$0xff]
        %v186 = vadd.f32 %v182, %v183
        %187 = vadd.xlane.f32.xlu0 %v186
        %v188 = vpop.xlane.xlu0 %187
        %v189 = vadd.f32 %v184, %v185
        %190 = vadd.xlane.f32.xlu0 %v189
        %v191 = vpop.xlane.xlu0 %190
        %v192 = vmul.f32 %v188, 0.00390625
        %v193 = vmul.f32 %v191, 0.00390625
        %v194 = vmax.f32 %v182, %v183
        %195 = vmax.xlane.f32.xlu0 %v194
        %v196 = vpop.xlane.xlu0 %195
        %v197 = vmax.f32 %v184, %v185
        %198 = vmax.xlane.f32.xlu0 %v197
        %v199 = vpop.xlane.xlu0 %198
        %v200 = vadd.f32 %v192, %v196
        %v201 = vadd.f32 %v193, %v199
        %vm204 = vcmask 1040384
        %v205 = vrot.slane %v200, 7
        %v206 = vrot.slane %v201, 7
        %v207 = vsel %vm204, %v205, %v206
        %v211 = vsel %vm204, 0.0, %v205
        %v212 = vsel %vm204, %v206, 0.0
        %s213 = sld [smem:[#allocation3]]
        %v214 = vstv %s213
        %v215 = vmul.f32 %v214, %v211
        %v216 = vmul.f32 %v214, %v207
        %v217 = vadd.f32 %v215, 0.0
        %v218 = vadd.f32 %v216, 0.0
        %s219 = sld [smem:[#allocation3 + $0x1]]
        %v220 = vstv %s219
        %v221 = vmul.f32 %v220, %v211
        %v222 = vmul.f32 %v220, %v207
        %v223 = vmul.f32 %v220, %v212
        %vm227 = vcmask 1046528
        %v228 = vrot.slane %v221, 1
        %v229 = vrot.slane %v222, 1
        %v230 = vsel %vm227, %v228, %v229
        %v231 = vrot.slane %v223, 1
        %v232 = vsel %vm227, %v229, %v231
        %v235 = vadd.f32 %v217, %v230
        %v236 = vadd.f32 %v218, %v232
        %s237 = sld [smem:[#allocation3 + $0x2]]
        %v238 = vstv %s237
        %v239 = vmul.f32 %v238, %v211
        %v240 = vmul.f32 %v238, %v207
        %v241 = vmul.f32 %v238, %v212
        %vm245 = vcmask 1045504
        %v246 = vrot.slane %v239, 2
        %v247 = vrot.slane %v240, 2
        %v248 = vsel %vm245, %v246, %v247
        %v249 = vrot.slane %v241, 2
        %v250 = vsel %vm245, %v247, %v249
        %v253 = vadd.f32 %v235, %v248
        %v254 = vadd.f32 %v236, %v250
        %v255 = vxor.u32 %v253, 2147483648
        %v256 = vxor.u32 %v254, 2147483648
        %v257 = vmul.f32 %v255, 1.442695
        %v258 = vpow.pop %v257
        %v259 = vmul.f32 %v256, 1.442695
        %v260 = vpow.pop %v259
        %v261 = vadd.f32 %v258, 1.0
        %v262 = vadd.f32 %v260, 1.0
        %v263 = vrcp.pop %v261
        %v264 = vmul.f32 1.0, %v263
        %v265 = vrcp.pop %v262
        %v266 = vmul.f32 1.0, %v265
        %268 = vset.pattern.permute.xlu0 0
        %269 = vperm.xlu0 %268, %v264
        %v270 = vpop.permute.xlu0 %269
        %273 = vset.pattern.permute.xlu0 0
        %274 = vperm.xlu0 %273, %v266
        %v275 = vpop.permute.xlu0 %274
        %v277 = vmul.f32 %v182, %v270
        %v278 = vmul.f32 %v183, %v270
        %v279 = vmul.f32 %v184, %v275
        %v280 = vmul.f32 %v185, %v275
        %v281 = vmax.f32 %v277, %v279
        %v282 = vrot.slane %v281, 4
        %v283 = vmax.f32 %v281, %v282
        %v284 = vrot.slane %v283, 2
        %v285 = vmax.f32 %v283, %v284
        %v286 = vrot.slane %v285, 1
        %v287 = vmax.f32 %v285, %v286
        %v288 = vmax.f32 %v278, %v280
        %v289 = vrot.slane %v288, 4
        %v290 = vmax.f32 %v288, %v289
        %v291 = vrot.slane %v290, 2
        %v292 = vmax.f32 %v290, %v291
        %v293 = vrot.slane %v292, 1
        %v294 = vmax.f32 %v292, %v293
        %v295 = vadd.f32 %v277, %v279
        %v296 = vrot.slane %v295, 4
        %v297 = vadd.f32 %v295, %v296
        %v298 = vrot.slane %v297, 2
        %v299 = vadd.f32 %v297, %v298
        %v300 = vrot.slane %v299, 1
        %v301 = vadd.f32 %v299, %v300
        %v302 = vadd.f32 %v278, %v280
        %v303 = vrot.slane %v302, 4
        %v304 = vadd.f32 %v302, %v303
        %v305 = vrot.slane %v304, 2
        %v306 = vadd.f32 %v304, %v305
        %v307 = vrot.slane %v306, 1
        %v308 = vadd.f32 %v306, %v307
        %v309 = vmul.f32 %v301, 0.0625
        %v310 = vmul.f32 %v308, 0.0625
        %v311 = vsel %vm204, %v287, %v309
        %v312 = vsel %vm204, %v294, %v310
        %313 = vrot.lane.b32.xlu0 %v311, 34
        %v314 = vpop.permute.xlu0 %313
        %315 = vrot.lane.b32.xlu0 %v312, 34
        %v316 = vpop.permute.xlu0 %315
        %v317 = vlaneseq
        %v318 = vand.u32 %v317, 127
        %vm319 = vcmp.lt.s32.totalorder %v318, 34
        %v320 = vsel %vm319, %v314, %v316
        %v321 = vsel %vm319, %v316, %v314
        %v322 = vld [vmem:[#allocation4] sm:$0xf]
        %v325 = vcombine.low %v321, %v320
        %v327 = vunpack.c.l.s4 1983009808
        %v328 = vunpack.c.0.s8 %v327
        %v329 = vlaneseq
        %v330 = vshrl.u32 %v329, 7
        %v331 = vsub.s32 %v328, %v330
        %v332 = vrot.slane %v325, %v331
        %v334 = vmul.f32 %v322, %v332
        %v335 = vadd.f32 %v334, 0.0
        %336 = vrot.lane.b32.xlu0 %v311, 33
        %v337 = vpop.permute.xlu0 %336
        %338 = vrot.lane.b32.xlu0 %v312, 33
        %v339 = vpop.permute.xlu0 %338
        %vm340 = vcmp.lt.s32.totalorder %v318, 33
        %v341 = vsel %vm340, %v337, %v339
        %v342 = vsel %vm340, %v339, %v337
        %s343 = scalar_lea.vmem [#allocation4], 4
        %v344 = vld [vmem:[%s343] sm:$0xf]
        %v347 = vcombine.low %v342, %v341
        %v349 = vunpack.c.l.s4 1983009808
        %v350 = vunpack.c.0.s8 %v349
        %v351 = vlaneseq
        %v352 = vshrl.u32 %v351, 7
        %v353 = vsub.s32 %v350, %v352
        %v354 = vrot.slane %v347, %v353
        %v356 = vmul.f32 %v344, %v354
        %v357 = vadd.f32 %v335, %v356
        %358 = vrot.lane.b32.xlu0 %v311, 32
        %v359 = vpop.permute.xlu0 %358
        %360 = vrot.lane.b32.xlu0 %v312, 32
        %v361 = vpop.permute.xlu0 %360
        %vm362 = vcmp.lt.s32.totalorder %v318, 32
        %v363 = vsel %vm362, %v359, %v361
        %v364 = vsel %vm362, %v361, %v359
        %s365 = scalar_lea.vmem [#allocation4], 8
        %v366 = vld [vmem:[%s365] sm:$0xf]
        %v369 = vcombine.low %v364, %v363
        %v371 = vunpack.c.l.s4 1983009808
        %v372 = vunpack.c.0.s8 %v371
        %v373 = vlaneseq
        %v374 = vshrl.u32 %v373, 7
        %v375 = vsub.s32 %v372, %v374
        %v376 = vrot.slane %v369, %v375
        %v378 = vmul.f32 %v366, %v376
        %v379 = vadd.f32 %v357, %v378
        %380 = vrot.lane.b32.xlu0 %v311, 31
        %v381 = vpop.permute.xlu0 %380
        %382 = vrot.lane.b32.xlu0 %v312, 31
        %v383 = vpop.permute.xlu0 %382
        %vm384 = vcmp.lt.s32.totalorder %v318, 31
        %v385 = vsel %vm384, %v381, %v383
        %v386 = vsel %vm384, %v383, %v381
        %s387 = scalar_lea.vmem [#allocation4], 12
        %v388 = vld [vmem:[%s387] sm:$0xf]
        %v391 = vcombine.low %v386, %v385
        %v393 = vunpack.c.l.s4 1983009808
        %v394 = vunpack.c.0.s8 %v393
        %v395 = vlaneseq
        %v396 = vshrl.u32 %v395, 7
        %v397 = vsub.s32 %v394, %v396
        %v398 = vrot.slane %v391, %v397
        %v400 = vmul.f32 %v388, %v398
        %v401 = vadd.f32 %v379, %v400
        %402 = vrot.lane.b32.xlu0 %v311, 30
        %v403 = vpop.permute.xlu0 %402
        %404 = vrot.lane.b32.xlu0 %v312, 30
        %v405 = vpop.permute.xlu0 %404
        %vm406 = vcmp.lt.s32.totalorder %v318, 30
        %v407 = vsel %vm406, %v403, %v405
        %v408 = vsel %vm406, %v405, %v403
        %s409 = scalar_lea.vmem [#allocation4], 16
        %v410 = vld [vmem:[%s409] sm:$0xf]
        %v413 = vcombine.low %v408, %v407
        %v415 = vunpack.c.l.s4 1983009808
        %v416 = vunpack.c.0.s8 %v415
        %v417 = vlaneseq
        %v418 = vshrl.u32 %v417, 7
        %v419 = vsub.s32 %v416, %v418
        %v420 = vrot.slane %v413, %v419
        %v422 = vmul.f32 %v410, %v420
        %v423 = vadd.f32 %v401, %v422
        %424 = vrot.lane.b32.xlu0 %v311, 18
        %v425 = vpop.permute.xlu0 %424
        %426 = vrot.lane.b32.xlu0 %v312, 18
        %v427 = vpop.permute.xlu0 %426
        %vm428 = vcmp.lt.s32.totalorder %v318, 18
        %v429 = vsel %vm428, %v425, %v427
        %v430 = vsel %vm428, %v427, %v425
        %s431 = scalar_lea.vmem [#allocation4], 20
        %v432 = vld [vmem:[%s431] sm:$0xf]
        %v435 = vcombine.low %v430, %v429
        %v437 = vunpack.c.l.s4 1983009808
        %v438 = vunpack.c.0.s8 %v437
        %v439 = vlaneseq
        %v440 = vshrl.u32 %v439, 7
        %v441 = vsub.s32 %v438, %v440
        %v442 = vrot.slane %v435, %v441
        %v444 = vmul.f32 %v432, %v442
        %v445 = vadd.f32 %v423, %v444
        %446 = vrot.lane.b32.xlu0 %v311, 17
        %v447 = vpop.permute.xlu0 %446
        %448 = vrot.lane.b32.xlu0 %v312, 17
        %v449 = vpop.permute.xlu0 %448
        %vm450 = vcmp.lt.s32.totalorder %v318, 17
        %v451 = vsel %vm450, %v447, %v449
        %v452 = vsel %vm450, %v449, %v447
        %s453 = scalar_lea.vmem [#allocation4], 24
        %v454 = vld [vmem:[%s453] sm:$0xf]
        %v457 = vcombine.low %v452, %v451
        %v459 = vunpack.c.l.s4 1983009808
        %v460 = vunpack.c.0.s8 %v459
        %v461 = vlaneseq
        %v462 = vshrl.u32 %v461, 7
        %v463 = vsub.s32 %v460, %v462
        %v464 = vrot.slane %v457, %v463
        %v466 = vmul.f32 %v454, %v464
        %v467 = vadd.f32 %v445, %v466
        %468 = vrot.lane.b32.xlu0 %v311, 16
        %v469 = vpop.permute.xlu0 %468
        %470 = vrot.lane.b32.xlu0 %v312, 16
        %v471 = vpop.permute.xlu0 %470
        %vm472 = vcmp.lt.s32.totalorder %v318, 16
        %v473 = vsel %vm472, %v469, %v471
        %v474 = vsel %vm472, %v471, %v469
        %s475 = scalar_lea.vmem [#allocation4], 28
        %v476 = vld [vmem:[%s475] sm:$0xf]
        %v479 = vcombine.low %v474, %v473
        %v481 = vunpack.c.l.s4 1983009808
        %v482 = vunpack.c.0.s8 %v481
        %v483 = vlaneseq
        %v484 = vshrl.u32 %v483, 7
        %v485 = vsub.s32 %v482, %v484
        %v486 = vrot.slane %v479, %v485
        %v488 = vmul.f32 %v476, %v486
        %v489 = vadd.f32 %v467, %v488
        %490 = vrot.lane.b32.xlu0 %v311, 15
        %v491 = vpop.permute.xlu0 %490
        %492 = vrot.lane.b32.xlu0 %v312, 15
        %v493 = vpop.permute.xlu0 %492
        %vm494 = vcmp.lt.s32.totalorder %v318, 15
        %v495 = vsel %vm494, %v491, %v493
        %v496 = vsel %vm494, %v493, %v491
        %s497 = scalar_lea.vmem [#allocation4], 32
        %v498 = vld [vmem:[%s497] sm:$0xf]
        %v501 = vcombine.low %v496, %v495
        %v503 = vunpack.c.l.s4 1983009808
        %v504 = vunpack.c.0.s8 %v503
        %v505 = vlaneseq
        %v506 = vshrl.u32 %v505, 7
        %v507 = vsub.s32 %v504, %v506
        %v508 = vrot.slane %v501, %v507
        %v510 = vmul.f32 %v498, %v508
        %v511 = vadd.f32 %v489, %v510
        %512 = vrot.lane.b32.xlu0 %v311, 14
        %v513 = vpop.permute.xlu0 %512
        %514 = vrot.lane.b32.xlu0 %v312, 14
        %v515 = vpop.permute.xlu0 %514
        %vm516 = vcmp.lt.s32.totalorder %v318, 14
        %v517 = vsel %vm516, %v513, %v515
        %v518 = vsel %vm516, %v515, %v513
        %s519 = scalar_lea.vmem [#allocation4], 36
        %v520 = vld [vmem:[%s519] sm:$0xf]
        %v523 = vcombine.low %v518, %v517
        %v525 = vunpack.c.l.s4 1983009808
        %v526 = vunpack.c.0.s8 %v525
        %v527 = vlaneseq
        %v528 = vshrl.u32 %v527, 7
        %v529 = vsub.s32 %v526, %v528
        %v530 = vrot.slane %v523, %v529
        %v532 = vmul.f32 %v520, %v530
        %v533 = vadd.f32 %v511, %v532
        %534 = vrot.lane.b32.xlu0 %v311, 2
        %v535 = vpop.permute.xlu0 %534
        %536 = vrot.lane.b32.xlu0 %v312, 2
        %v537 = vpop.permute.xlu0 %536
        %vm538 = vcmp.lt.s32.totalorder %v318, 2
        %v539 = vsel %vm538, %v535, %v537
        %v540 = vsel %vm538, %v537, %v535
        %s541 = scalar_lea.vmem [#allocation4], 40
        %v542 = vld [vmem:[%s541] sm:$0xf]
        %v545 = vcombine.low %v540, %v539
        %v547 = vunpack.c.l.s4 1983009808
        %v548 = vunpack.c.0.s8 %v547
        %v549 = vlaneseq
        %v550 = vshrl.u32 %v549, 7
        %v551 = vsub.s32 %v548, %v550
        %v552 = vrot.slane %v545, %v551
        %v554 = vmul.f32 %v542, %v552
        %v555 = vadd.f32 %v533, %v554
        %556 = vrot.lane.b32.xlu0 %v311, 1
        %v557 = vpop.permute.xlu0 %556
        %558 = vrot.lane.b32.xlu0 %v312, 1
        %v559 = vpop.permute.xlu0 %558
        %vm560 = vcmp.lt.s32.totalorder %v318, 1
        %v561 = vsel %vm560, %v557, %v559
        %v562 = vsel %vm560, %v559, %v557
        %s563 = scalar_lea.vmem [#allocation4], 44
        %v564 = vld [vmem:[%s563] sm:$0xf]
        %v567 = vcombine.low %v562, %v561
        %v569 = vunpack.c.l.s4 1983009808
        %v570 = vunpack.c.0.s8 %v569
        %v571 = vlaneseq
        %v572 = vshrl.u32 %v571, 7
        %v573 = vsub.s32 %v570, %v572
        %v574 = vrot.slane %v567, %v573
        %v576 = vmul.f32 %v564, %v574
        %v577 = vadd.f32 %v555, %v576
        %s578 = scalar_lea.vmem [#allocation4], 48
        %v579 = vld [vmem:[%s578] sm:$0xf]
        %v582 = vcombine.low %v311, %v312
        %v584 = vunpack.c.l.s4 1983009808
        %v585 = vunpack.c.0.s8 %v584
        %v586 = vlaneseq
        %v587 = vshrl.u32 %v586, 7
        %v588 = vsub.s32 %v585, %v587
        %v589 = vrot.slane %v582, %v588
        %v591 = vmul.f32 %v579, %v589
        %v592 = vadd.f32 %v577, %v591
        %593 = vrot.lane.b32.xlu0 %v311, 127
        %v594 = vpop.permute.xlu0 %593
        %595 = vrot.lane.b32.xlu0 %v312, 127
        %v596 = vpop.permute.xlu0 %595
        %vm597 = vcmp.lt.s32.totalorder %v318, 127
        %v598 = vsel %vm597, %v594, %v596
        %v599 = vsel %vm597, %v596, %v594
        %s600 = scalar_lea.vmem [#allocation4], 52
        %v601 = vld [vmem:[%s600] sm:$0xf]
        %v604 = vcombine.low %v598, %v599
        %v606 = vunpack.c.l.s4 1983009808
        %v607 = vunpack.c.0.s8 %v606
        %v608 = vlaneseq
        %v609 = vshrl.u32 %v608, 7
        %v610 = vsub.s32 %v607, %v609
        %v611 = vrot.slane %v604, %v610
        %v613 = vmul.f32 %v601, %v611
        %v614 = vadd.f32 %v592, %v613
        %615 = vrot.lane.b32.xlu0 %v311, 126
        %v616 = vpop.permute.xlu0 %615
        %617 = vrot.lane.b32.xlu0 %v312, 126
        %v618 = vpop.permute.xlu0 %617
        %vm619 = vcmp.lt.s32.totalorder %v318, 126
        %v620 = vsel %vm619, %v616, %v618
        %v621 = vsel %vm619, %v618, %v616
        %s622 = scalar_lea.vmem [#allocation4], 56
        %v623 = vld [vmem:[%s622] sm:$0xf]
        %v626 = vcombine.low %v620, %v621
        %v628 = vunpack.c.l.s4 1983009808
        %v629 = vunpack.c.0.s8 %v628
        %v630 = vlaneseq
        %v631 = vshrl.u32 %v630, 7
        %v632 = vsub.s32 %v629, %v631
        %v633 = vrot.slane %v626, %v632
        %v635 = vmul.f32 %v623, %v633
        %v636 = vadd.f32 %v614, %v635
        %637 = vrot.lane.b32.xlu0 %v311, 114
        %v638 = vpop.permute.xlu0 %637
        %639 = vrot.lane.b32.xlu0 %v312, 114
        %v640 = vpop.permute.xlu0 %639
        %vm641 = vcmp.lt.s32.totalorder %v318, 114
        %v642 = vsel %vm641, %v638, %v640
        %v643 = vsel %vm641, %v640, %v638
        %s644 = scalar_lea.vmem [#allocation4], 60
        %v645 = vld [vmem:[%s644] sm:$0xf]
        %v648 = vcombine.low %v642, %v643
        %v650 = vunpack.c.l.s4 1983009808
        %v651 = vunpack.c.0.s8 %v650
        %v652 = vlaneseq
        %v653 = vshrl.u32 %v652, 7
        %v654 = vsub.s32 %v651, %v653
        %v655 = vrot.slane %v648, %v654
        %v657 = vmul.f32 %v645, %v655
        %v658 = vadd.f32 %v636, %v657
        %659 = vrot.lane.b32.xlu0 %v311, 113
        %v660 = vpop.permute.xlu0 %659
        %661 = vrot.lane.b32.xlu0 %v312, 113
        %v662 = vpop.permute.xlu0 %661
        %vm663 = vcmp.lt.s32.totalorder %v318, 113
        %v664 = vsel %vm663, %v660, %v662
        %v665 = vsel %vm663, %v662, %v660
        %s666 = scalar_lea.vmem [#allocation4], 64
        %v667 = vld [vmem:[%s666] sm:$0xf]
        %v670 = vcombine.low %v664, %v665
        %v672 = vunpack.c.l.s4 1983009808
        %v673 = vunpack.c.0.s8 %v672
        %v674 = vlaneseq
        %v675 = vshrl.u32 %v674, 7
        %v676 = vsub.s32 %v673, %v675
        %v677 = vrot.slane %v670, %v676
        %v679 = vmul.f32 %v667, %v677
        %v680 = vadd.f32 %v658, %v679
        %681 = vrot.lane.b32.xlu0 %v311, 112
        %v682 = vpop.permute.xlu0 %681
        %683 = vrot.lane.b32.xlu0 %v312, 112
        %v684 = vpop.permute.xlu0 %683
        %vm685 = vcmp.lt.s32.totalorder %v318, 112
        %v686 = vsel %vm685, %v682, %v684
        %v687 = vsel %vm685, %v684, %v682
        %s688 = scalar_lea.vmem [#allocation4], 68
        %v689 = vld [vmem:[%s688] sm:$0xf]
        %v692 = vcombine.low %v686, %v687
        %v694 = vunpack.c.l.s4 1983009808
        %v695 = vunpack.c.0.s8 %v694
        %v696 = vlaneseq
        %v697 = vshrl.u32 %v696, 7
        %v698 = vsub.s32 %v695, %v697
        %v699 = vrot.slane %v692, %v698
        %v701 = vmul.f32 %v689, %v699
        %v702 = vadd.f32 %v680, %v701
        %703 = vrot.lane.b32.xlu0 %v311, 111
        %v704 = vpop.permute.xlu0 %703
        %705 = vrot.lane.b32.xlu0 %v312, 111
        %v706 = vpop.permute.xlu0 %705
        %vm707 = vcmp.lt.s32.totalorder %v318, 111
        %v708 = vsel %vm707, %v704, %v706
        %v709 = vsel %vm707, %v706, %v704
        %s710 = scalar_lea.vmem [#allocation4], 72
        %v711 = vld [vmem:[%s710] sm:$0xf]
        %v714 = vcombine.low %v708, %v709
        %v716 = vunpack.c.l.s4 1983009808
        %v717 = vunpack.c.0.s8 %v716
        %v718 = vlaneseq
        %v719 = vshrl.u32 %v718, 7
        %v720 = vsub.s32 %v717, %v719
        %v721 = vrot.slane %v714, %v720
        %v723 = vmul.f32 %v711, %v721
        %v724 = vadd.f32 %v702, %v723
        %725 = vrot.lane.b32.xlu0 %v311, 110
        %v726 = vpop.permute.xlu0 %725
        %727 = vrot.lane.b32.xlu0 %v312, 110
        %v728 = vpop.permute.xlu0 %727
        %vm729 = vcmp.lt.s32.totalorder %v318, 110
        %v730 = vsel %vm729, %v726, %v728
        %v731 = vsel %vm729, %v728, %v726
        %s732 = scalar_lea.vmem [#allocation4], 76
        %v733 = vld [vmem:[%s732] sm:$0xf]
        %v736 = vcombine.low %v730, %v731
        %v738 = vunpack.c.l.s4 1983009808
        %v739 = vunpack.c.0.s8 %v738
        %v740 = vlaneseq
        %v741 = vshrl.u32 %v740, 7
        %v742 = vsub.s32 %v739, %v741
        %v743 = vrot.slane %v736, %v742
        %v745 = vmul.f32 %v733, %v743
        %v746 = vadd.f32 %v724, %v745
        %747 = vrot.lane.b32.xlu0 %v311, 98
        %v748 = vpop.permute.xlu0 %747
        %749 = vrot.lane.b32.xlu0 %v312, 98
        %v750 = vpop.permute.xlu0 %749
        %vm751 = vcmp.lt.s32.totalorder %v318, 98
        %v752 = vsel %vm751, %v748, %v750
        %v753 = vsel %vm751, %v750, %v748
        %s754 = scalar_lea.vmem [#allocation4], 80
        %v755 = vld [vmem:[%s754] sm:$0xf]
        %v758 = vcombine.low %v752, %v753
        %v760 = vunpack.c.l.s4 1983009808
        %v761 = vunpack.c.0.s8 %v760
        %v762 = vlaneseq
        %v763 = vshrl.u32 %v762, 7
        %v764 = vsub.s32 %v761, %v763
        %v765 = vrot.slane %v758, %v764
        %v767 = vmul.f32 %v755, %v765
        %v768 = vadd.f32 %v746, %v767
        %769 = vrot.lane.b32.xlu0 %v311, 97
        %v770 = vpop.permute.xlu0 %769
        %771 = vrot.lane.b32.xlu0 %v312, 97
        %v772 = vpop.permute.xlu0 %771
        %vm773 = vcmp.lt.s32.totalorder %v318, 97
        %v774 = vsel %vm773, %v770, %v772
        %v775 = vsel %vm773, %v772, %v770
        %s776 = scalar_lea.vmem [#allocation4], 84
        %v777 = vld [vmem:[%s776] sm:$0xf]
        %v780 = vcombine.low %v774, %v775
        %v782 = vunpack.c.l.s4 1983009808
        %v783 = vunpack.c.0.s8 %v782
        %v784 = vlaneseq
        %v785 = vshrl.u32 %v784, 7
        %v786 = vsub.s32 %v783, %v785
        %v787 = vrot.slane %v780, %v786
        %v789 = vmul.f32 %v777, %v787
        %v790 = vadd.f32 %v768, %v789
        %791 = vrot.lane.b32.xlu0 %v311, 96
        %v792 = vpop.permute.xlu0 %791
        %793 = vrot.lane.b32.xlu0 %v312, 96
        %v794 = vpop.permute.xlu0 %793
        %vm795 = vcmp.lt.s32.totalorder %v318, 96
        %v796 = vsel %vm795, %v792, %v794
        %v797 = vsel %vm795, %v794, %v792
        %s798 = scalar_lea.vmem [#allocation4], 88
        %v799 = vld [vmem:[%s798] sm:$0xf]
        %v802 = vcombine.low %v796, %v797
        %v804 = vunpack.c.l.s4 1983009808
        %v805 = vunpack.c.0.s8 %v804
        %v806 = vlaneseq
        %v807 = vshrl.u32 %v806, 7
        %v808 = vsub.s32 %v805, %v807
        %v809 = vrot.slane %v802, %v808
        %v811 = vmul.f32 %v799, %v809
        %v812 = vadd.f32 %v790, %v811
        %813 = vrot.lane.b32.xlu0 %v311, 95
        %v814 = vpop.permute.xlu0 %813
        %815 = vrot.lane.b32.xlu0 %v312, 95
        %v816 = vpop.permute.xlu0 %815
        %vm817 = vcmp.lt.s32.totalorder %v318, 95
        %v818 = vsel %vm817, %v814, %v816
        %v819 = vsel %vm817, %v816, %v814
        %s820 = scalar_lea.vmem [#allocation4], 92
        %v821 = vld [vmem:[%s820] sm:$0xf]
        %v824 = vcombine.low %v818, %v819
        %v826 = vunpack.c.l.s4 1983009808
        %v827 = vunpack.c.0.s8 %v826
        %v828 = vlaneseq
        %v829 = vshrl.u32 %v828, 7
        %v830 = vsub.s32 %v827, %v829
        %v831 = vrot.slane %v824, %v830
        %v833 = vmul.f32 %v821, %v831
        %v834 = vadd.f32 %v812, %v833
        %835 = vrot.lane.b32.xlu0 %v311, 94
        %v836 = vpop.permute.xlu0 %835
        %837 = vrot.lane.b32.xlu0 %v312, 94
        %v838 = vpop.permute.xlu0 %837
        %vm839 = vcmp.lt.s32.totalorder %v318, 94
        %v840 = vsel %vm839, %v836, %v838
        %v841 = vsel %vm839, %v838, %v836
        %s842 = scalar_lea.vmem [#allocation4], 96
        %v843 = vld [vmem:[%s842] sm:$0xf]
        %v846 = vcombine.low %v840, %v841
        %v848 = vunpack.c.l.s4 1983009808
        %v849 = vunpack.c.0.s8 %v848
        %v850 = vlaneseq
        %v851 = vshrl.u32 %v850, 7
        %v852 = vsub.s32 %v849, %v851
        %v853 = vrot.slane %v846, %v852
        %v855 = vmul.f32 %v843, %v853
        %v856 = vadd.f32 %v834, %v855
        %v858 = vrot.slane %v856, 7
        %v859 = vrot.slane %v858, 2
        %v861 = vadd.f32 %v856, %v859
        %v862 = vxor.u32 %v861, 2147483648
        %v863 = vmul.f32 %v862, 1.442695
        %v864 = vpow.pop %v863
        %v865 = vadd.f32 %v864, 1.0
        %v866 = vrcp.pop %v865
        %v867 = vmul.f32 1.0, %v866
        %v869 = vlaneseq
        %v870 = vshrl.u32 %v869, 7
        %v871 = vsub.s32 0, %v870
        %v872 = vrot.slane %v867, %v871
        %v873 = vlaneseq
        %v874 = vshrl.u32 %v873, 7
        %v875 = vsub.s32 2, %v874
        %v876 = vrot.slane %v867, %v875
        %v879 = vlaneseq
        %v880 = vshrl.u32 %v879, 7
        %v881 = vsub.s32 0, %v880
        %v882 = vrot.slane %v872, %v881
        %v883 = vlaneseq
        %v884 = vshrl.u32 %v883, 7
        %v885 = vsub.s32 0, %v884
        %v886 = vrot.slane %v876, %v885
        %v887 = vmul.f32 %v277, %v882
        %v888 = vmul.f32 %v278, %v886
        %v889 = vmul.f32 %v279, %v882
        %v890 = vmul.f32 %v280, %v886
        %891 = vst [vmem:[%s181] sm:$0xff] %v887
        %892 = vst [vmem:[%s181 + $0x8] sm:$0xff] %v888
        %893 = vst [vmem:[%s181 + $0x10] sm:$0xff] %v889
        %894 = vst [vmem:[%s181 + $0x18] sm:$0xff] %v890
        %s895 = sand.u32 %s80, 1
        %s896 = scalar_lea.sflag [#allocation6], %s895
        %s897 = sand.u32 %s80, 1
        %s898 = smul.addr %s897, 32
        %s899 = scalar_lea.vmem [#allocation9], %s898
        // Predicated region
        $region37: #{tpu_custom_call.1} parent=27 // pred_check
          %p900 = pneg %p90
        $region38: #{tpu_custom_call.1} parent=27 // pred_check_branch
          %902 = sbr.rel (%p900) target = $region40
        $region39: #{tpu_custom_call.1} parent=27 // pred_region
          %s904 = ssub.s32 512, 512
          %905 = vsyncadd %s896, %s904
          %s906 = smul.addr %s25, 4
          %s907 = smul.addr %s906, 128
          %s908 = scalar_lea.hbm %s3, %s907
          %s909 = sshll.u32 %s899, 4
          %s910 = int_to_ptr.vmem [resolvable:$true] %s909
          %915 = dma.vmem_to_hbm [thread:$0]  %s910, 512, %s908, %s896, 256, 256, 16
        $region40: #{tpu_custom_call.1} parent=27 // pred_fallthru
          _
      $region28: #{tpu_custom_call.1} parent=5 // pred_fallthru
        _
      %p916 = scmp.le.s32.totalorder 2, %s20
      // Predicated region
      $region41: #{tpu_custom_call.1} parent=5 // pred_check
        %p917 = pneg %p916
      $region42: #{tpu_custom_call.1} parent=5 // pred_check_branch
        %919 = sbr.rel (%p917) target = $region44
      $region43: #{tpu_custom_call.1} parent=5 // pred_region
        %s920 = ssub.s32 %s20, 2
        // Predicated region
        $region45: #{tpu_custom_call.1} parent=43 // pred_check
          %p921 = pneg %p96
        $region46: #{tpu_custom_call.1} parent=43 // pred_check_branch
          %923 = sbr.rel (%p921) target = $region48
        $region47: #{tpu_custom_call.1} parent=43 // pred_region
          %s924 = sand.u32 %s81, 1
          %s925 = scalar_lea.sflag [#allocation6], %s924
          %s926 = sand.u32 %s81, 1
          %s927 = smul.addr %s926, 32
          %s928 = scalar_lea.vmem [#allocation9], %s927
          %929 = dma.done %s925, 512
        $region48: #{tpu_custom_call.1} parent=43 // pred_fallthru
          _
      $region44: #{tpu_custom_call.1} parent=5 // pred_fallthru
        _
    $region6: #{tpu_custom_call.1} parent=1 // loop_footer
      %s24 = sadd.s32 1, %s20
    $region7: #{tpu_custom_call.1} parent=1 // loop_footer_branch
      %19 = sbr.rel target = $region3
    $region8: #{tpu_custom_call.1} parent=1 // loop_exit
      _
    %930 = vsyncpa [#allocation5], 1
    %s931 = scalar_lea.sflag [#allocation5], 1
    %932 = vsyncpa %s931, 1
    %933 = vsyncpa [#allocation8], 1
    %s934 = scalar_lea.sflag [#allocation8], 1
    %935 = vsyncpa %s934, 1
    %936 = vsyncpa [#allocation6], 1
    %s937 = scalar_lea.sflag [#allocation6], 1
    %938 = vsyncpa %s937, 1

</llo_original>
